<compile_context>
chip_gen: v6e
topology: v6e:2x2x1
jax: 0.10.0
libtpu: 0.0.40
codegen_flags: <defaults>
</compile_context>

<pallas_src>
import functools

import jax
import jax.numpy as jnp
from jax.experimental import pallas as pl
from jax.experimental.pallas import tpu as pltpu

LN_EPS = 1e-5  # PyTorch nn.LayerNorm default


def _round_up(a, b):
    return ((a + b - 1) // b) * b


# --------------------------------------------------------------------------- #
# Pre-pass: class-invariant LayerNorm1(x) and K/V projections, computed ONCE. #
# --------------------------------------------------------------------------- #
def _kv_prepass_kernel(x_ref, ln1w_ref, ln1b_ref, wk_ref, wv_ref, k_ref, v_ref):
    f32 = jnp.float32
    x = x_ref[...]                               # (1, N, C) native dtype
    _, n, c = x.shape
    xf = x.reshape(n, c).astype(f32)
    mu = jnp.mean(xf, axis=-1, keepdims=True)
    var = jnp.mean((xf - mu) ** 2, axis=-1, keepdims=True)
    xn = (xf - mu) * jax.lax.rsqrt(var + LN_EPS)
    xn = xn * ln1w_ref[...].astype(f32) + ln1b_ref[...].astype(f32)
    xn = xn.astype(x.dtype)                      # MXU operands in native dtype
    k = jnp.dot(xn, wk_ref[...], preferred_element_type=f32)
    v = jnp.dot(xn, wv_ref[...], preferred_element_type=f32)
    k_ref[...] = k.astype(k_ref.dtype).reshape(1, n, c)
    v_ref[...] = v.astype(v_ref.dtype).reshape(1, n, c)


# --------------------------------------------------------------------------- #
# Main kernel: one grid step == one tile of classes, whole batch.             #
# --------------------------------------------------------------------------- #
def _class_block_kernel(num_heads,
                        tok_ref, k_ref, v_ref,
                        ln1w_ref, ln1b_ref,
                        wq_ref, wk_ref, wv_ref, wp_ref, bp_ref,
                        ln2w_ref, ln2b_ref,
                        w1_ref, b1_ref, w2_ref, b2_ref,
                        out_ref):
    f32 = jnp.float32
    K = k_ref[...]                               # (B, N, C) class-invariant keys
    V = v_ref[...]                               # (B, N, C) class-invariant values
    B, N, C = K.shape
    TC = tok_ref.shape[0]                        # classes per grid step
    H = num_heads
    dh = C // H
    scale = dh ** -0.5
    cdt = K.dtype                                # compute dtype for MXU operands

    # --- LayerNorm1 of the token rows (batch-invariant) ----------------------
    tok = tok_ref[...].astype(f32)               # (TC, C)
    mu = jnp.mean(tok, axis=-1, keepdims=True)
    var = jnp.mean((tok - mu) ** 2, axis=-1, keepdims=True)
    tn = (tok - mu) * jax.lax.rsqrt(var + LN_EPS)
    tn = tn * ln1w_ref[...].astype(f32) + ln1b_ref[...].astype(f32)
    tn_c = tn.astype(cdt)

    # --- q / k0 / v0: class-dependent but batch-invariant --------------------
    q = jnp.dot(tn_c, wq_ref[...], preferred_element_type=f32) * scale   # (TC, C)
    k0 = jnp.dot(tn_c, wk_ref[...], preferred_element_type=f32)          # (TC, C)
    v0 = jnp.dot(tn_c, wv_ref[...], preferred_element_type=f32)          # (TC, C)

    # Broadcast once over batch (hoisted out of the head loop).
    qb = jnp.broadcast_to(q[None], (B, TC, C))                           # f32
    qbc = qb.astype(cdt)                                                 # MXU operand
    k0b = jnp.broadcast_to(k0[None], (B, TC, C))
    v0b = jnp.broadcast_to(v0[None], (B, TC, C))

    # --- ClassAttention: per-head batched matmuls on the MXU -----------------
    o_heads = []
    for h in range(H):
        sl = slice(h * dh, (h + 1) * dh)
        Kh = K[:, :, sl]                                                 # (B, N, dh)
        Vh = V[:, :, sl]                                                 # (B, N, dh)
        # logits against the patch keys: (B, TC, dh) x (B, N, dh) -> (B, TC, N)
        logits = jnp.einsum('bcd,bnd->bcn', qbc[:, :, sl], Kh,
                            preferred_element_type=f32)
        # logit against the class token's own key (key index 0): (B, TC)
        l0 = jnp.sum(qb[:, :, sl] * k0b[:, :, sl], axis=-1)
        m = jnp.maximum(jnp.max(logits, axis=-1), l0)                    # (B, TC)
        p0 = jnp.exp(l0 - m)                                             # (B, TC)
        p = jnp.exp(logits - m[:, :, None])                              # (B, TC, N)
        denom = p0 + jnp.sum(p, axis=-1)                                 # (B, TC)
        inv = pl.reciprocal(denom, approx=True)                          # EUP slot
        # attention-weighted values: (B, TC, N) x (B, N, dh) -> (B, TC, dh)
        pv = jnp.einsum('bcn,bnd->bcd', p.astype(cdt), Vh,
                        preferred_element_type=f32)
        o_h = (pv + p0[:, :, None] * v0b[:, :, sl]) * inv[:, :, None]
        o_heads.append(o_h)
    o = jnp.concatenate(o_heads, axis=-1)                                # (B, TC, C)

    # --- output projection + residual with the ORIGINAL token ----------------
    of = o.reshape(B * TC, C).astype(cdt)
    xc = jnp.dot(of, wp_ref[...], preferred_element_type=f32) + bp_ref[...].astype(f32)
    cls1 = xc.reshape(B, TC, C) + tok[None, :, :]                        # (B, TC, C)

    # --- LayerNorm2 + MLP + residual -----------------------------------------
    mu2 = jnp.mean(cls1, axis=-1, keepdims=True)
    var2 = jnp.mean((cls1 - mu2) ** 2, axis=-1, keepdims=True)
    c2 = (cls1 - mu2) * jax.lax.rsqrt(var2 + LN_EPS)
    c2 = c2 * ln2w_ref[...].astype(f32).reshape(1, 1, C) \
            + ln2b_ref[...].astype(f32).reshape(1, 1, C)

    c2f = c2.reshape(B * TC, C).astype(cdt)
    h1 = jnp.dot(c2f, w1_ref[...], preferred_element_type=f32) + b1_ref[...].astype(f32)
    h1 = jax.nn.gelu(h1, approximate=False)                              # exact GELU
    h2 = jnp.dot(h1.astype(cdt), w2_ref[...], preferred_element_type=f32) \
         + b2_ref[...].astype(f32)

    out = cls1 + h2.reshape(B, TC, C)
    out_ref[...] = out.astype(out_ref.dtype)


# --------------------------------------------------------------------------- #
# Wrapper                                                                     #
# --------------------------------------------------------------------------- #
def semantic_block(x, tokens, params, num_heads, *, class_tile=16,
                   vmem_limit_bytes=None):
    B, N, C = x.shape
    assert C % num_heads == 0, "emb_dim must be divisible by num_heads"
    num_classes = tokens.shape[0]
    hid = params["w1"].shape[1]
    dtype = x.dtype

    def cp(extra=()):
        kw = dict(dimension_semantics=tuple(extra) if extra else ("parallel",))
        if vmem_limit_bytes is not None:
            kw["vmem_limit_bytes"] = vmem_limit_bytes
        return pltpu.CompilerParams(**kw)

    # ---- Phase 1: class-invariant K/V (done once, not per class) -----------
    K, V = pl.pallas_call(
        _kv_prepass_kernel,
        out_shape=(jax.ShapeDtypeStruct((B, N, C), dtype),
                   jax.ShapeDtypeStruct((B, N, C), dtype)),
        grid_spec=pltpu.PrefetchScalarGridSpec(
            num_scalar_prefetch=0,
            grid=(B,),
            in_specs=[
                pl.BlockSpec((1, N, C), lambda b: (b, 0, 0)),
                pl.BlockSpec((1, C), lambda b: (0, 0)),
                pl.BlockSpec((1, C), lambda b: (0, 0)),
                pl.BlockSpec((C, C), lambda b: (0, 0)),
                pl.BlockSpec((C, C), lambda b: (0, 0)),
            ],
            out_specs=(pl.BlockSpec((1, N, C), lambda b: (b, 0, 0)),
                       pl.BlockSpec((1, N, C), lambda b: (b, 0, 0))),
        ),
        compiler_params=cp(("parallel",)),
    )(x, params["ln1_w"], params["ln1_b"], params["wk"], params["wv"])

    # ---- Phase 2: per-class-tile attention + MLP ----------------------------
    TC = min(class_tile, _round_up(num_classes, 8))
    TC = _round_up(TC, 8)                         # keep sublane dim (8,128)-friendly
    P = _round_up(num_classes, TC)                # padded class count
    tok2 = tokens.reshape(num_classes, C)
    if P != num_classes:
        tok2 = jnp.pad(tok2, ((0, P - num_classes), (0, 0)))

    def const(shape):
        n = len(shape)
        return pl.BlockSpec(shape, lambda c, _n=n: (0,) * _n)

    # NOTE: the class-invariant blocks (K, V, weights) have constant index_maps,
    # so Pallas only DMAs them once; at production shapes one would additionally
    # single-buffer them / use bf16 to fit v7x's 64 MiB VMEM.
    out = pl.pallas_call(
        functools.partial(_class_block_kernel, num_heads),
        out_shape=jax.ShapeDtypeStruct((B, P, C), dtype),
        grid_spec=pltpu.PrefetchScalarGridSpec(
            num_scalar_prefetch=0,
            grid=(P // TC,),
            in_specs=[
                pl.BlockSpec((TC, C), lambda c: (c, 0)),   # class tokens (tiled)
                const((B, N, C)),                          # K (class-invariant)
                const((B, N, C)),                          # V (class-invariant)
                const((1, C)), const((1, C)),              # ln1 gamma / beta
                const((C, C)), const((C, C)), const((C, C)),  # Wq, Wk, Wv
                const((C, C)), const((1, C)),              # Wproj, bproj
                const((1, C)), const((1, C)),              # ln2 gamma / beta
                const((C, hid)), const((1, hid)),          # MLP W1, b1
                const((hid, C)), const((1, C)),            # MLP W2, b2
            ],
            out_specs=pl.BlockSpec((B, TC, C), lambda c: (0, c, 0)),
        ),
        compiler_params=cp(("parallel",)),                 # classes are independent
    )(tok2, K, V,
      params["ln1_w"], params["ln1_b"],
      params["wq"], params["wk"], params["wv"],
      params["wp"], params["bp"],
      params["ln2_w"], params["ln2_b"],
      params["w1"], params["b1"], params["w2"], params["b2"])

    # (B, P, C) -> (num_classes, B, C): matches the stacked list-of-(B, C) output.
    return jnp.transpose(out, (1, 0, 2))[:num_classes]


# ----------------------------- pure-JAX reference -----------------------------
def _ln(x, w, b):
    mu = x.mean(-1, keepdims=True)
    var = ((x - mu) ** 2).mean(-1, keepdims=True)
    return (x - mu) * jax.lax.rsqrt(var + LN_EPS) * w + b


def reference(x, tokens, p, num_heads):
    B, N, C = x.shape
    H = num_heads
    dh = C // H
    scale = dh ** -0.5
    outs = []
    for c in range(tokens.shape[0]):
        tok = tokens[c]                                                # (1, C)
        u = jnp.concatenate([jnp.broadcast_to(tok[None], (B, 1, C)), x], axis=1)
        un = _ln(u, p["ln1_w"].reshape(C), p["ln1_b"].reshape(C))
        q = (un[:, 0] @ p["wq"]) * scale
        k = (un @ p["wk"]).reshape(B, N + 1, H, dh)
        v = (un @ p["wv"]).reshape(B, N + 1, H, dh)
        qh = q.reshape(B, H, dh)
        logits = jnp.einsum("bhd,bnhd->bhn", qh, k)
        attn = jax.nn.softmax(logits, axis=-1)
        o = jnp.einsum("bhn,bnhd->bhd", attn, v).reshape(B, C)
        xc = o @ p["wp"] + p["bp"].reshape(C)
        cls1 = xc + tok.reshape(1, C)
        c2 = _ln(cls1, p["ln2_w"].reshape(C), p["ln2_b"].reshape(C))
        h = jax.nn.gelu(c2 @ p["w1"] + p["b1"].reshape(-1), approximate=False)
        mo = h @ p["w2"] + p["b2"].reshape(C)
        outs.append(cls1 + mo)
    return jnp.stack(outs, axis=0)


if __name__ == "__main__":
    # Small, module-consistent shapes (production: C=768, 12 heads, 1000 classes).
    B, N, C = 2, 8, 32          # batch, patches, emb_dim
    num_heads = 4
    num_classes = 3
    hid = 4 * C                 # mlp_ratio = 4

    key = jax.random.PRNGKey(0)
    ks = jax.random.split(key, 8)
    f32 = jnp.float32

    x = jax.random.normal(ks[0], (B, N, C), f32)
    tokens = 0.02 * jax.random.normal(ks[1], (num_classes, 1, C), f32)

    # Weights stored as (in, out) so y = x @ W (PyTorch weight transposed).
    params = {
        "ln1_w": jnp.ones((1, C), f32),
        "ln1_b": jnp.zeros((1, C), f32),
        "wq": 0.02 * jax.random.normal(ks[2], (C, C), f32),
        "wk": 0.02 * jax.random.normal(ks[3], (C, C), f32),
        "wv": 0.02 * jax.random.normal(ks[4], (C, C), f32),
        "wp": 0.02 * jax.random.normal(ks[5], (C, C), f32),
        "bp": jnp.zeros((1, C), f32),
        "ln2_w": jnp.ones((1, C), f32),
        "ln2_b": jnp.zeros((1, C), f32),
        "w1": 0.02 * jax.random.normal(ks[6], (C, hid), f32),
        "b1": jnp.zeros((1, hid), f32),
        "w2": 0.02 * jax.random.normal(ks[7], (hid, C), f32),
        "b2": jnp.zeros((1, C), f32),
    }

    out = semantic_block(x, tokens, params, num_heads)
    out = jax.block_until_ready(out)

    ref = reference(x, tokens, params, num_heads)
    assert out.shape == (num_classes, B, C), out.shape
    # tolerance covers the approximate (EUP) softmax reciprocal
    assert jnp.allclose(out, ref, atol=1e-3, rtol=1e-3), (
        float(jnp.max(jnp.abs(out - ref)))
    )
    print("KERNEL_OK")
</pallas_src>

<mosaic_0001>
module attributes {stable_mosaic.version = 11 : i64} {
  func.func @_kv_prepass_kernel(%arg0: i32, %arg1: memref<1x8x32xf32, #tpu.memory_space<vmem>>, %arg2: memref<1x32xf32, #tpu.memory_space<vmem>>, %arg3: memref<1x32xf32, #tpu.memory_space<vmem>>, %arg4: memref<32x32xf32, #tpu.memory_space<vmem>>, %arg5: memref<32x32xf32, #tpu.memory_space<vmem>>, %arg6: memref<1x8x32xf32, #tpu.memory_space<vmem>>, %arg7: memref<1x8x32xf32, #tpu.memory_space<vmem>>) attributes {dimension_semantics = [#tpu.dimension_semantics<parallel>], iteration_bounds = array<i64: 2>, scalar_prefetch = 0 : i64, scratch_operands = 0 : i64, tpu.core_type = #tpu.core_type<tc>, window_params = [{transform_indices = @transform_0, window_bounds = array<i64: 1, 8, 32>}, {pipeline_mode = #tpu.pipeline_mode<synchronous>, transform_indices = @transform_1, window_bounds = array<i64: 1, 32>}, {pipeline_mode = #tpu.pipeline_mode<synchronous>, transform_indices = @transform_2, window_bounds = array<i64: 1, 32>}, {pipeline_mode = #tpu.pipeline_mode<synchronous>, transform_indices = @transform_3, window_bounds = array<i64: 32, 32>}, {pipeline_mode = #tpu.pipeline_mode<synchronous>, transform_indices = @transform_4, window_bounds = array<i64: 32, 32>}, {transform_indices = @transform_5, window_bounds = array<i64: 1, 8, 32>}, {transform_indices = @transform_6, window_bounds = array<i64: 1, 8, 32>}]} {
    %c0 = arith.constant 0 : index
    %c0_0 = arith.constant 0 : index
    %c0_1 = arith.constant 0 : index
    %0 = vector.load %arg1[%c0, %c0_0, %c0_1] : memref<1x8x32xf32, #tpu.memory_space<vmem>>, vector<1x8x32xf32>
    %1 = vector.shape_cast %0 : vector<1x8x32xf32> to vector<8x32xf32>
    %cst = arith.constant dense<0.000000e+00> : vector<8xf32>
    %2 = vector.multi_reduction <add>, %1, %cst [1] : vector<8x32xf32> to vector<8xf32>
    %3 = vector.shape_cast %2 : vector<8xf32> to vector<8x1xf32>
    %cst_2 = arith.constant 3.200000e+01 : f32
    %4 = vector.broadcast %cst_2 : f32 to vector<8x1xf32>
    %5 = arith.divf %3, %4 : vector<8x1xf32>
    %6 = vector.broadcast %5 : vector<8x1xf32> to vector<8x32xf32>
    %7 = arith.subf %1, %6 : vector<8x32xf32>
    %8 = arith.mulf %7, %7 : vector<8x32xf32>
    %cst_3 = arith.constant dense<0.000000e+00> : vector<8xf32>
    %9 = vector.multi_reduction <add>, %8, %cst_3 [1] : vector<8x32xf32> to vector<8xf32>
    %10 = vector.shape_cast %9 : vector<8xf32> to vector<8x1xf32>
    %cst_4 = arith.constant 3.200000e+01 : f32
    %11 = vector.broadcast %cst_4 : f32 to vector<8x1xf32>
    %12 = arith.divf %10, %11 : vector<8x1xf32>
    %13 = vector.broadcast %5 : vector<8x1xf32> to vector<8x32xf32>
    %14 = arith.subf %1, %13 : vector<8x32xf32>
    %cst_5 = arith.constant 9.99999974E-6 : f32
    %15 = vector.broadcast %cst_5 : f32 to vector<8x1xf32>
    %16 = arith.addf %12, %15 : vector<8x1xf32>
    %17 = math.rsqrt %16 : vector<8x1xf32>
    %18 = vector.broadcast %17 : vector<8x1xf32> to vector<8x32xf32>
    %19 = arith.mulf %14, %18 : vector<8x32xf32>
    %c0_6 = arith.constant 0 : index
    %c0_7 = arith.constant 0 : index
    %20 = vector.load %arg2[%c0_6, %c0_7] : memref<1x32xf32, #tpu.memory_space<vmem>>, vector<1x32xf32>
    %21 = vector.broadcast %20 : vector<1x32xf32> to vector<8x32xf32>
    %22 = arith.mulf %19, %21 : vector<8x32xf32>
    %c0_8 = arith.constant 0 : index
    %c0_9 = arith.constant 0 : index
    %23 = vector.load %arg3[%c0_8, %c0_9] : memref<1x32xf32, #tpu.memory_space<vmem>>, vector<1x32xf32>
    %24 = vector.broadcast %23 : vector<1x32xf32> to vector<8x32xf32>
    %25 = arith.addf %22, %24 : vector<8x32xf32>
    %c0_10 = arith.constant 0 : index
    %c0_11 = arith.constant 0 : index
    %26 = vector.load %arg4[%c0_10, %c0_11] : memref<32x32xf32, #tpu.memory_space<vmem>>, vector<32x32xf32>
    %cst_12 = arith.constant dense<0.000000e+00> : vector<8x32xf32>
    %27 = tpu.matmul %25, %26, %cst_12 {dimension_numbers = #tpu.dot_dimension_numbers<[1], [0], [0], [1], [0, 0, 1, 1], [], []>} : vector<8x32xf32>, vector<32x32xf32>, vector<8x32xf32> -> vector<8x32xf32>
    %c0_13 = arith.constant 0 : index
    %c0_14 = arith.constant 0 : index
    %28 = vector.load %arg5[%c0_13, %c0_14] : memref<32x32xf32, #tpu.memory_space<vmem>>, vector<32x32xf32>
    %cst_15 = arith.constant dense<0.000000e+00> : vector<8x32xf32>
    %29 = tpu.matmul %25, %28, %cst_15 {dimension_numbers = #tpu.dot_dimension_numbers<[1], [0], [0], [1], [0, 0, 1, 1], [], []>} : vector<8x32xf32>, vector<32x32xf32>, vector<8x32xf32> -> vector<8x32xf32>
    %30 = vector.shape_cast %27 : vector<8x32xf32> to vector<1x8x32xf32>
    %c0_16 = arith.constant 0 : index
    %c0_17 = arith.constant 0 : index
    %c0_18 = arith.constant 0 : index
    %31 = vector.load %arg6[%c0_16, %c0_17, %c0_18] : memref<1x8x32xf32, #tpu.memory_space<vmem>>, vector<1x8x32xf32>
    tpu.vector_store %arg6[%c0_16, %c0_17, %c0_18], %30 {strides = array<i32>} : memref<1x8x32xf32, #tpu.memory_space<vmem>>, vector<1x8x32xf32>,
    %32 = vector.shape_cast %29 : vector<8x32xf32> to vector<1x8x32xf32>
    %c0_19 = arith.constant 0 : index
    %c0_20 = arith.constant 0 : index
    %c0_21 = arith.constant 0 : index
    %33 = vector.load %arg7[%c0_19, %c0_20, %c0_21] : memref<1x8x32xf32, #tpu.memory_space<vmem>>, vector<1x8x32xf32>
    tpu.vector_store %arg7[%c0_19, %c0_20, %c0_21], %32 {strides = array<i32>} : memref<1x8x32xf32, #tpu.memory_space<vmem>>, vector<1x8x32xf32>,
    return
  }
  func.func @transform_0(%arg0: i32) -> (i32, i32, i32) {
    %c0_i32 = arith.constant 0 : i32
    %c0_i32_0 = arith.constant 0 : i32
    %c0_i32_1 = arith.constant 0 : i32
    return %arg0, %c0_i32, %c0_i32_0 : i32, i32, i32
  }
  func.func @transform_1(%arg0: i32) -> (i32, i32) {
    %c0_i32 = arith.constant 0 : i32
    %c0_i32_0 = arith.constant 0 : i32
    %c0_i32_1 = arith.constant 0 : i32
    return %c0_i32, %c0_i32_0 : i32, i32
  }
  func.func @transform_2(%arg0: i32) -> (i32, i32) {
    %c0_i32 = arith.constant 0 : i32
    %c0_i32_0 = arith.constant 0 : i32
    %c0_i32_1 = arith.constant 0 : i32
    return %c0_i32, %c0_i32_0 : i32, i32
  }
  func.func @transform_3(%arg0: i32) -> (i32, i32) {
    %c0_i32 = arith.constant 0 : i32
    %c0_i32_0 = arith.constant 0 : i32
    %c0_i32_1 = arith.constant 0 : i32
    return %c0_i32, %c0_i32_0 : i32, i32
  }
  func.func @transform_4(%arg0: i32) -> (i32, i32) {
    %c0_i32 = arith.constant 0 : i32
    %c0_i32_0 = arith.constant 0 : i32
    %c0_i32_1 = arith.constant 0 : i32
    return %c0_i32, %c0_i32_0 : i32, i32
  }
  func.func @transform_5(%arg0: i32) -> (i32, i32, i32) {
    %c0_i32 = arith.constant 0 : i32
    %c0_i32_0 = arith.constant 0 : i32
    %c0_i32_1 = arith.constant 0 : i32
    return %arg0, %c0_i32, %c0_i32_0 : i32, i32, i32
  }
  func.func @transform_6(%arg0: i32) -> (i32, i32, i32) {
    %c0_i32 = arith.constant 0 : i32
    %c0_i32_0 = arith.constant 0 : i32
    %c0_i32_1 = arith.constant 0 : i32
    return %arg0, %c0_i32, %c0_i32_0 : i32, i32, i32
  }
}

</mosaic_0001>

<llo_original>
// kernel: tpu_custom_call.1
$region0: #{tpu_custom_call.1}
  #allocation0 [shape = 'u32[]', space=smem, size = 0x4, offset = 0x4, fixed_abs, tag = 'smem constant byte address 0x4 - core index']
  #allocation1 [shape = 'u32[144,128]{1,0:T(1,128)}', space=vmem, size = 0x12000, scoped, tag = 'internal scratch']
  %s0 = inlined_call_operand.hbm [shape: f32[2,8,32], index: 0, kind: input, shape index: {}]
  %s1 = inlined_call_operand.vmem [shape: f32[1,32], index: 1, kind: input, shape index: {}]
  %s2 = inlined_call_operand.vmem [shape: f32[1,32], index: 2, kind: input, shape index: {}]
  %s3 = inlined_call_operand.hbm [shape: f32[32,32], index: 3, kind: input, shape index: {}]
  %s4 = inlined_call_operand.hbm [shape: f32[32,32], index: 4, kind: input, shape index: {}]
  %s5 = inlined_call_operand.hbm [shape: f32[2,8,32], index: 5, kind: output, shape index: {0}]
  %s6 = inlined_call_operand.hbm [shape: f32[2,8,32], index: 6, kind: output, shape index: {1}]
  %7 = xla_tuple %s5, %s6
  %s8 = sld [smem:[#allocation0]]
  $region73: #{tpu_custom_call.1} parent=0
    _
  %s10 = ssub.s32 1, %s8
  %s11 = scalar_select 0, %s10, %s8
  $region1: #{tpu_custom_call.1} parent=0
    #allocation2 [shape = 'u8[8192]{0}', space=vmem, size = 0x2000, scoped, tag = 'input window, operand 0']
    #allocation3 [shape = 's32[2]{0}', space=sflag, size = 0x8, scoped, tag = 'scoped memory for tpu_custom_call.1']
    #allocation4 [shape = 's32[2]{0}', space=sflag, size = 0x8, scoped, tag = 'scoped memory for tpu_custom_call.1']
    #allocation5 [shape = 'u8[16384]{0}', space=vmem, size = 0x4000, scoped, tag = 'input window, operand 3, single buffered']
    #allocation6 [shape = 's32[1]{0}', space=sflag, size = 0x4, scoped, tag = 'scoped memory for tpu_custom_call.1']
    #allocation7 [shape = 'u8[16384]{0}', space=vmem, size = 0x4000, scoped, tag = 'input window, operand 4, single buffered']
    #allocation8 [shape = 'u8[8192]{0}', space=vmem, size = 0x2000, scoped, tag = 'output window, operand 0']
    #allocation9 [shape = 'u8[8192]{0}', space=vmem, size = 0x2000, scoped, tag = 'output window, operand 1']
    #allocation10 [shape = 's32[2]{0}', space=sflag, size = 0x8, scoped, tag = 'scoped memory for tpu_custom_call.1']
    %12 = vsyncpa [#allocation3], 0
    %s13 = scalar_lea.sflag [#allocation3], 1
    %14 = vsyncpa %s13, 0
    %15 = vsyncpa [#allocation6], 0
    %16 = vsyncpa [#allocation4], 0
    %s17 = scalar_lea.sflag [#allocation4], 1
    %18 = vsyncpa %s17, 0
    %19 = vsyncpa [#allocation10], 0
    %s20 = scalar_lea.sflag [#allocation10], 1
    %21 = vsyncpa %s20, 0
    loop: start=0, step=1, limit=4
    $region2: #{tpu_custom_call.1} parent=1 // loop_pre_header
      _
    $region3: #{tpu_custom_call.1} parent=1 // loop_header
      %s23 = sphi 0, %s27
      %p24 = scmp.ge.s32.totalorder %s23, 4
      %s33 = sphi 0, %s35
      %s36 = sphi 0, %s33
      %s37 = sphi 0, %s36
      %s53 = sphi 0, %s37
      %s57 = sphi 0, %s57
      %s59 = sphi 0, %s57
      %s60 = sphi 0, %s59
      %s74 = sphi 0, %s60
      %s78 = sphi 0, %s78
      %s80 = sphi 0, %s78
      %s81 = sphi 0, %s80
      %s95 = sphi 0, %s81
      %s99 = sphi 0, %s99
      %s101 = sphi 0, %s99
      %s102 = sphi 0, %s101
      %s116 = sphi 0, %s102
      %s120 = sphi 0, %s120
      %s122 = sphi 0, %s120
      %s123 = sphi 0, %s122
      %s137 = sphi 0, %s123
      %s143 = sphi 0, %s145
      %s146 = sphi 0, %s143
      %s147 = sphi 0, %s146
      %s163 = sphi 0, %s147
      %s169 = sphi 0, %s171
      %s172 = sphi 0, %s169
      %s173 = sphi 0, %s172
      %s189 = sphi 0, %s173
    $region4: #{tpu_custom_call.1} parent=1 // loop_header_branch
      %26 = sbr.rel (%p24) target = $region8
    $region5: #{tpu_custom_call.1} parent=1 // loop_body
      %s28 = ssub.s32 %s23, 1
      %s29 = ssub.s32 %s23, 2
      %s30 = sadd.s32 %s23, 1
      %s31 = ssub.s32 %s23, %s30
      %p32 = scmp.eq.s32.totalorder %s31, 0
      %s34 = sadd.s32 %s33, 1
      %s35 = scalar_select %p32, %s33, %s34
      %p38 = pneg %p32
      %p39 = scmp.eq.s32.totalorder %s23, 1
      %p40 = por %p38, %p39
      %p41 = scmp.ne.s32.totalorder %s33, %s36
      %p42 = scmp.eq.s32.totalorder %s23, 0
      %p43 = por %p41, %p42
      %p44 = scmp.ne.s32.totalorder %s33, %s36
      %p45 = scmp.eq.s32.totalorder %s28, 1
      %p46 = por %p44, %p45
      %p47 = scmp.ne.s32.totalorder %s36, %s37
      %p48 = scmp.eq.s32.totalorder %s28, 0
      %p49 = por %p47, %p48
      %p50 = scmp.ne.s32.totalorder %s36, %s37
      %p51 = scmp.eq.s32.totalorder %s29, 1
      %p52 = por %p50, %p51
      %p54 = scmp.ne.s32.totalorder %s37, %s53
      %p55 = scmp.eq.s32.totalorder %s29, 0
      %p56 = por %p54, %p55
      %s58 = sadd.s32 %s57, 1
      %p61 = scmp.eq.s32.totalorder %s23, 1
      %p62 = scmp.ne.s32.totalorder %s57, %s59
      %p63 = scmp.eq.s32.totalorder %s23, 0
      %p64 = por %p62, %p63
      %p65 = scmp.ne.s32.totalorder %s57, %s59
      %p66 = scmp.eq.s32.totalorder %s28, 1
      %p67 = por %p65, %p66
      %p68 = scmp.ne.s32.totalorder %s59, %s60
      %p69 = scmp.eq.s32.totalorder %s28, 0
      %p70 = por %p68, %p69
      %p71 = scmp.ne.s32.totalorder %s59, %s60
      %p72 = scmp.eq.s32.totalorder %s29, 1
      %p73 = por %p71, %p72
      %p75 = scmp.ne.s32.totalorder %s60, %s74
      %p76 = scmp.eq.s32.totalorder %s29, 0
      %p77 = por %p75, %p76
      %s79 = sadd.s32 %s78, 1
      %p82 = scmp.eq.s32.totalorder %s23, 1
      %p83 = scmp.ne.s32.totalorder %s78, %s80
      %p84 = scmp.eq.s32.totalorder %s23, 0
      %p85 = por %p83, %p84
      %p86 = scmp.ne.s32.totalorder %s78, %s80
      %p87 = scmp.eq.s32.totalorder %s28, 1
      %p88 = por %p86, %p87
      %p89 = scmp.ne.s32.totalorder %s80, %s81
      %p90 = scmp.eq.s32.totalorder %s28, 0
      %p91 = por %p89, %p90
      %p92 = scmp.ne.s32.totalorder %s80, %s81
      %p93 = scmp.eq.s32.totalorder %s29, 1
      %p94 = por %p92, %p93
      %p96 = scmp.ne.s32.totalorder %s81, %s95
      %p97 = scmp.eq.s32.totalorder %s29, 0
      %p98 = por %p96, %p97
      %s100 = sadd.s32 %s99, 1
      %p103 = scmp.eq.s32.totalorder %s23, 1
      %p104 = scmp.ne.s32.totalorder %s99, %s101
      %p105 = scmp.eq.s32.totalorder %s23, 0
      %p106 = por %p104, %p105
      %p107 = scmp.ne.s32.totalorder %s99, %s101
      %p108 = scmp.eq.s32.totalorder %s28, 1
      %p109 = por %p107, %p108
      %p110 = scmp.ne.s32.totalorder %s101, %s102
      %p111 = scmp.eq.s32.totalorder %s28, 0
      %p112 = por %p110, %p111
      %p113 = scmp.ne.s32.totalorder %s101, %s102
      %p114 = scmp.eq.s32.totalorder %s29, 1
      %p115 = por %p113, %p114
      %p117 = scmp.ne.s32.totalorder %s102, %s116
      %p118 = scmp.eq.s32.totalorder %s29, 0
      %p119 = por %p117, %p118
      %s121 = sadd.s32 %s120, 1
      %p124 = scmp.eq.s32.totalorder %s23, 1
      %p125 = scmp.ne.s32.totalorder %s120, %s122
      %p126 = scmp.eq.s32.totalorder %s23, 0
      %p127 = por %p125, %p126
      %p128 = scmp.ne.s32.totalorder %s120, %s122
      %p129 = scmp.eq.s32.totalorder %s28, 1
      %p130 = por %p128, %p129
      %p131 = scmp.ne.s32.totalorder %s122, %s123
      %p132 = scmp.eq.s32.totalorder %s28, 0
      %p133 = por %p131, %p132
      %p134 = scmp.ne.s32.totalorder %s122, %s123
      %p135 = scmp.eq.s32.totalorder %s29, 1
      %p136 = por %p134, %p135
      %p138 = scmp.ne.s32.totalorder %s123, %s137
      %p139 = scmp.eq.s32.totalorder %s29, 0
      %p140 = por %p138, %p139
      %s141 = ssub.s32 %s23, %s30
      %p142 = scmp.eq.s32.totalorder %s141, 0
      %s144 = sadd.s32 %s143, 1
      %s145 = scalar_select %p142, %s143, %s144
      %p148 = pneg %p142
      %p149 = scmp.eq.s32.totalorder %s23, 1
      %p150 = por %p148, %p149
      %p151 = scmp.ne.s32.totalorder %s143, %s146
      %p152 = scmp.eq.s32.totalorder %s23, 0
      %p153 = por %p151, %p152
      %p154 = scmp.ne.s32.totalorder %s143, %s146
      %p155 = scmp.eq.s32.totalorder %s28, 1
      %p156 = por %p154, %p155
      %p157 = scmp.ne.s32.totalorder %s146, %s147
      %p158 = scmp.eq.s32.totalorder %s28, 0
      %p159 = por %p157, %p158
      %p160 = scmp.ne.s32.totalorder %s146, %s147
      %p161 = scmp.eq.s32.totalorder %s29, 1
      %p162 = por %p160, %p161
      %p164 = scmp.ne.s32.totalorder %s147, %s163
      %p165 = scmp.eq.s32.totalorder %s29, 0
      %p166 = por %p164, %p165
      %s167 = ssub.s32 %s23, %s30
      %p168 = scmp.eq.s32.totalorder %s167, 0
      %s170 = sadd.s32 %s169, 1
      %s171 = scalar_select %p168, %s169, %s170
      %p174 = pneg %p168
      %p175 = scmp.eq.s32.totalorder %s23, 1
      %p176 = por %p174, %p175
      %p177 = scmp.ne.s32.totalorder %s169, %s172
      %p178 = scmp.eq.s32.totalorder %s23, 0
      %p179 = por %p177, %p178
      %p180 = scmp.ne.s32.totalorder %s169, %s172
      %p181 = scmp.eq.s32.totalorder %s28, 1
      %p182 = por %p180, %p181
      %p183 = scmp.ne.s32.totalorder %s172, %s173
      %p184 = scmp.eq.s32.totalorder %s28, 0
      %p185 = por %p183, %p184
      %p186 = scmp.ne.s32.totalorder %s172, %s173
      %p187 = scmp.eq.s32.totalorder %s29, 1
      %p188 = por %p186, %p187
      %p190 = scmp.ne.s32.totalorder %s173, %s189
      %p191 = scmp.eq.s32.totalorder %s29, 0
      %p192 = por %p190, %p191
      %p193 = scmp.le.s32.totalorder 1, %s23
      %p194 = scmp.lt.s32.totalorder %s23, 3
      %p195 = pnand %p193, %p194
      %p196 = pneg %p195
      // Predicated region
      $region9: #{tpu_custom_call.1} parent=5 // pred_check
        _
      $region10: #{tpu_custom_call.1} parent=5 // pred_check_branch
        %198 = sbr.rel (%p195) target = $region12
      $region11: #{tpu_custom_call.1} parent=5 // pred_region
        %s199 = ssub.s32 %s23, 1
        // Predicated region
        $region13: #{tpu_custom_call.1} parent=11 // pred_check
          %p200 = pneg %p70
        $region14: #{tpu_custom_call.1} parent=11 // pred_check_branch
          %202 = sbr.rel (%p200) target = $region16
        $region15: #{tpu_custom_call.1} parent=11 // pred_region
          _
        $region16: #{tpu_custom_call.1} parent=11 // pred_fallthru
          _
        // Predicated region
        $region17: #{tpu_custom_call.1} parent=11 // pred_check
          %p203 = pneg %p91
        $region18: #{tpu_custom_call.1} parent=11 // pred_check_branch
          %205 = sbr.rel (%p203) target = $region20
        $region19: #{tpu_custom_call.1} parent=11 // pred_region
          _
        $region20: #{tpu_custom_call.1} parent=11 // pred_fallthru
          _
        // Predicated region
        $region21: #{tpu_custom_call.1} parent=11 // pred_check
          %p206 = pneg %p112
        $region22: #{tpu_custom_call.1} parent=11 // pred_check_branch
          %208 = sbr.rel (%p206) target = $region24
        $region23: #{tpu_custom_call.1} parent=11 // pred_region
          %s210 = ssub.s32 512, 512
          %211 = vsyncadd [#allocation6], %s210
          %s212 = sshll.u32 [#allocation5], 4
          %s213 = int_to_ptr.vmem [resolvable:$true] %s212
          %218 = dma.hbm_to_vmem [thread:$0]  %s3, 512, %s213, [#allocation6], 128, 128, 8
        $region24: #{tpu_custom_call.1} parent=11 // pred_fallthru
          _
        // Predicated region
        $region25: #{tpu_custom_call.1} parent=11 // pred_check
          %p219 = pneg %p133
        $region26: #{tpu_custom_call.1} parent=11 // pred_check_branch
          %221 = sbr.rel (%p219) target = $region28
        $region27: #{tpu_custom_call.1} parent=11 // pred_region
          %s223 = ssub.s32 512, 512
          %224 = vsyncadd [#allocation6], %s223
          %s225 = sshll.u32 [#allocation7], 4
          %s226 = int_to_ptr.vmem [resolvable:$true] %s225
          %231 = dma.hbm_to_vmem [thread:$0]  %s4, 512, %s226, [#allocation6], 128, 128, 8
        $region28: #{tpu_custom_call.1} parent=11 // pred_fallthru
          _
      $region12: #{tpu_custom_call.1} parent=5 // pred_fallthru
        _
      %p232 = scmp.lt.s32.totalorder %s23, 2
      // Predicated region
      $region29: #{tpu_custom_call.1} parent=5 // pred_check
        %p233 = pneg %p232
      $region30: #{tpu_custom_call.1} parent=5 // pred_check_branch
        %235 = sbr.rel (%p233) target = $region32
      $region31: #{tpu_custom_call.1} parent=5 // pred_region
        // Predicated region
        $region33: #{tpu_custom_call.1} parent=31 // pred_check
          %p236 = pneg %p43
        $region34: #{tpu_custom_call.1} parent=31 // pred_check_branch
          %238 = sbr.rel (%p236) target = $region36
        $region35: #{tpu_custom_call.1} parent=31 // pred_region
          %s239 = sand.u32 %s33, 1
          %s240 = scalar_lea.sflag [#allocation3], %s239
          %s241 = sand.u32 %s33, 1
          %s242 = smul.addr %s241, 8
          %s243 = scalar_lea.vmem [#allocation2], %s242
          %s245 = ssub.s32 128, 128
          %246 = vsyncadd %s240, %s245
          %s247 = smul.addr %s23, 128
          %s248 = scalar_lea.hbm %s0, %s247
          %s250 = sshll.u32 %s243, 4
          %s251 = int_to_ptr.vmem [resolvable:$true] %s250
          %253 = dma.hbm_to_vmem [thread:$0]  %s248, 128, %s251, %s240
        $region36: #{tpu_custom_call.1} parent=31 // pred_fallthru
          _
      $region32: #{tpu_custom_call.1} parent=5 // pred_fallthru
        _
      %p254 = scmp.le.s32.totalorder 1, %s23
      %p255 = scmp.lt.s32.totalorder %s23, 3
      %p256 = pnand %p254, %p255
      %p257 = pneg %p256
      // Predicated region
      $region37: #{tpu_custom_call.1} parent=5 // pred_check
        _
      $region38: #{tpu_custom_call.1} parent=5 // pred_check_branch
        %259 = sbr.rel (%p256) target = $region40
      $region39: #{tpu_custom_call.1} parent=5 // pred_region
        %s260 = ssub.s32 %s23, 1
        %s261 = sand.u32 %s36, 1
        %s262 = scalar_lea.sflag [#allocation3], %s261
        %s263 = sand.u32 %s36, 1
        %s264 = smul.addr %s263, 8
        %s265 = scalar_lea.vmem [#allocation2], %s264
        // Predicated region
        $region41: #{tpu_custom_call.1} parent=39 // pred_check
          %p266 = pneg %p49
        $region42: #{tpu_custom_call.1} parent=39 // pred_check_branch
          %268 = sbr.rel (%p266) target = $region44
        $region43: #{tpu_custom_call.1} parent=39 // pred_region
          %269 = dma.done %s262, 128
        $region44: #{tpu_custom_call.1} parent=39 // pred_fallthru
          _
        // Predicated region
        $region45: #{tpu_custom_call.1} parent=39 // pred_check
          %p270 = pneg %p112
        $region46: #{tpu_custom_call.1} parent=39 // pred_check_branch
          %272 = sbr.rel (%p270) target = $region48
        $region47: #{tpu_custom_call.1} parent=39 // pred_region
          %273 = dma.done [#allocation6], 512
        $region48: #{tpu_custom_call.1} parent=39 // pred_fallthru
          _
        // Predicated region
        $region49: #{tpu_custom_call.1} parent=39 // pred_check
          %p274 = pneg %p133
        $region50: #{tpu_custom_call.1} parent=39 // pred_check_branch
          %276 = sbr.rel (%p274) target = $region52
        $region51: #{tpu_custom_call.1} parent=39 // pred_region
          %277 = dma.done [#allocation6], 512
        $region52: #{tpu_custom_call.1} parent=39 // pred_fallthru
          _
        %s278 = sand.u32 %s36, 1
        %s279 = scalar_lea.sflag [#allocation3], %s278
        %s280 = sand.u32 %s36, 1
        %s281 = smul.addr %s280, 8
        %s282 = scalar_lea.vmem [#allocation2], %s281
        %p283 = pneg %p49
        %p284 = pneg %p46
        %p285 = pneg %p70
        %p286 = pneg %p67
        %p287 = pneg %p91
        %p288 = pneg %p88
        %p289 = pneg %p112
        %p290 = pneg %p109
        %p291 = pneg %p133
        %p292 = pneg %p130
        %p293 = pneg %p159
        %p294 = pneg %p156
        %s295 = sand.u32 %s146, 1
        %s296 = scalar_lea.sflag [#allocation4], %s295
        %s297 = sand.u32 %s146, 1
        %s298 = smul.addr %s297, 8
        %s299 = scalar_lea.vmem [#allocation8], %s298
        %p300 = pneg %p185
        %p301 = pneg %p182
        %s302 = sand.u32 %s172, 1
        %s303 = scalar_lea.sflag [#allocation10], %s302
        %s304 = sand.u32 %s172, 1
        %s305 = smul.addr %s304, 8
        %s306 = scalar_lea.vmem [#allocation9], %s305
        %v307 = vld [vmem:[%s265] sm:$0xff]
        %vm308 = vcmask 261120
        %v309 = vsel %vm308, %v307, 0.0
        %310 = vadd.xlane.f32.xlu0 %v309
        %v311 = vpop.xlane.xlu0 %310
        %v312 = vrcp.pop 32.0
        %v313 = vmul.f32 %v311, %v312
        %v314 = vsub.f32 %v307, %v313
        %v315 = vmul.f32 %v314, %v314
        %v316 = vsel %vm308, %v315, 0.0
        %317 = vadd.xlane.f32.xlu0 %v316
        %v318 = vpop.xlane.xlu0 %317
        %v319 = vmul.f32 %v318, %v312
        %v320 = vadd.f32 %v319, 1e-05
        %v321 = vrsqrt.pop %v320
        %v322 = vmul.f32 %v314, %v321
        %v323 = vld [vmem:[%s1] sm:$0x1]
        %v325 = vlaneseq
        %v326 = vshrl.u32 %v325, 7
        %v327 = vsub.s32 0, %v326
        %v328 = vrot.slane %v323, %v327
        %v330 = vmul.f32 %v322, %v328
        %v331 = vld [vmem:[%s2] sm:$0x1]
        %v333 = vlaneseq
        %v334 = vshrl.u32 %v333, 7
        %v335 = vsub.s32 0, %v334
        %v336 = vrot.slane %v331, %v335
        %v338 = vadd.f32 %v330, %v336
        %v339 = vld [vmem:[#allocation5] sm:$0xff]
        %v340 = vld [vmem:[#allocation5 + $0x8] sm:$0xff]
        %v341 = vld [vmem:[#allocation5 + $0x10] sm:$0xff]
        %v342 = vld [vmem:[#allocation5 + $0x18] sm:$0xff]
        %v344 = vsel %vm308, %v338, 0
        %346 = vmatprep.subr.mxu0 0.0
        %347 = vmatpush1.msra.mxu0 0.0
        %348 = vmatprep.subr.mxu0 0.0
        %349 = vmatpush1.msra.mxu0 0.0
        %350 = vmatprep.subr.mxu0 0.0
        %351 = vmatpush1.msra.mxu0 0.0
        %352 = vmatprep.subr.mxu0 0.0
        %353 = vmatpush1.msra.mxu0 0.0
        %354 = vmatprep.subr.mxu0 0.0
        %355 = vmatpush1.msra.mxu0 0.0
        %356 = vmatprep.subr.mxu0 0.0
        %357 = vmatpush1.msra.mxu0 0.0
        %358 = vmatprep.subr.mxu0 0.0
        %359 = vmatpush1.msra.mxu0 0.0
        %360 = vmatprep.subr.mxu0 0.0
        %361 = vmatpush1.msra.mxu0 0.0
        %362 = vmatprep.subr.mxu0 0.0
        %363 = vmatpush1.msra.mxu0 0.0
        %364 = vmatprep.subr.mxu0 0.0
        %365 = vmatpush1.msra.mxu0 0.0
        %366 = vmatprep.subr.mxu0 0.0
        %367 = vmatpush1.msra.mxu0 0.0
        %368 = vmatprep.subr.mxu0 0.0
        %369 = vmatpush1.msra.mxu0 0.0
        %370 = vmatprep.subr.mxu0 0.0
        %371 = vmatpush1.msra.mxu0 %v342
        %372 = vmatprep.subr.mxu0 0.0
        %373 = vmatpush1.msra.mxu0 %v341
        %374 = vmatprep.subr.mxu0 0.0
        %375 = vmatpush1.msra.mxu0 %v340
        %376 = vmatprep.subr.mxu0 0.0
        %377 = vmatpush1.msra.mxu0 %v339
        %378 = vmatprep.subr.mxu0 0.0
        %379 = vmatpush2.msra.mxu0 0.0
        %380 = vmatprep.subr.mxu0 0.0
        %381 = vmatpush2.msra.mxu0 0.0
        %382 = vmatprep.subr.mxu0 0.0
        %383 = vmatpush2.msra.mxu0 0.0
        %384 = vmatprep.subr.mxu0 0.0
        %385 = vmatpush2.msra.mxu0 0.0
        %386 = vmatprep.subr.mxu0 0.0
        %387 = vmatpush2.msra.mxu0 0.0
        %388 = vmatprep.subr.mxu0 0.0
        %389 = vmatpush2.msra.mxu0 0.0
        %390 = vmatprep.subr.mxu0 0.0
        %391 = vmatpush2.msra.mxu0 0.0
        %392 = vmatprep.subr.mxu0 0.0
        %393 = vmatpush2.msra.mxu0 0.0
        %394 = vmatprep.subr.mxu0 0.0
        %395 = vmatpush2.msra.mxu0 0.0
        %396 = vmatprep.subr.mxu0 0.0
        %397 = vmatpush2.msra.mxu0 0.0
        %398 = vmatprep.subr.mxu0 0.0
        %399 = vmatpush2.msra.mxu0 0.0
        %400 = vmatprep.subr.mxu0 0.0
        %401 = vmatpush2.msra.mxu0 0.0
        %402 = vmatprep.subr.mxu0 0.0
        %403 = vmatpush2.msra.mxu0 0.0
        %404 = vmatprep.subr.mxu0 0.0
        %405 = vmatpush2.msra.mxu0 0.0
        %406 = vmatprep.subr.mxu0 0.0
        %407 = vmatpush2.msra.mxu0 0.0
        %408 = vmatprep.subr.mxu0 0.0
        %409 = vmatpush2.msra.mxu0 0.0
        %410 = vmatprep.mubr.f32.mxu0 0.0
        %411 = vmatmul.mubr.f32.gmra.mxu0 %v344
        %v412 = vpop.f32.mrf.mxu0
        %v413 = vadd.f32 0.0, %v412
        %v414 = vpop.f32.mrf.mxu0
        %415 = vdwg.mxu0
        %v416 = vld [vmem:[#allocation7] sm:$0xff]
        %v417 = vld [vmem:[#allocation7 + $0x8] sm:$0xff]
        %v418 = vld [vmem:[#allocation7 + $0x10] sm:$0xff]
        %v419 = vld [vmem:[#allocation7 + $0x18] sm:$0xff]
        %420 = vmatprep.subr.mxu0 0.0
        %421 = vmatpush1.msra.mxu0 0.0
        %422 = vmatprep.subr.mxu0 0.0
        %423 = vmatpush1.msra.mxu0 0.0
        %424 = vmatprep.subr.mxu0 0.0
        %425 = vmatpush1.msra.mxu0 0.0
        %426 = vmatprep.subr.mxu0 0.0
        %427 = vmatpush1.msra.mxu0 0.0
        %428 = vmatprep.subr.mxu0 0.0
        %429 = vmatpush1.msra.mxu0 0.0
        %430 = vmatprep.subr.mxu0 0.0
        %431 = vmatpush1.msra.mxu0 0.0
        %432 = vmatprep.subr.mxu0 0.0
        %433 = vmatpush1.msra.mxu0 0.0
        %434 = vmatprep.subr.mxu0 0.0
        %435 = vmatpush1.msra.mxu0 0.0
        %436 = vmatprep.subr.mxu0 0.0
        %437 = vmatpush1.msra.mxu0 0.0
        %438 = vmatprep.subr.mxu0 0.0
        %439 = vmatpush1.msra.mxu0 0.0
        %440 = vmatprep.subr.mxu0 0.0
        %441 = vmatpush1.msra.mxu0 0.0
        %442 = vmatprep.subr.mxu0 0.0
        %443 = vmatpush1.msra.mxu0 0.0
        %444 = vmatprep.subr.mxu0 0.0
        %445 = vmatpush1.msra.mxu0 %v419
        %446 = vmatprep.subr.mxu0 0.0
        %447 = vmatpush1.msra.mxu0 %v418
        %448 = vmatprep.subr.mxu0 0.0
        %449 = vmatpush1.msra.mxu0 %v417
        %450 = vmatprep.subr.mxu0 0.0
        %451 = vmatpush1.msra.mxu0 %v416
        %452 = vmatprep.subr.mxu0 0.0
        %453 = vmatpush2.msra.mxu0 0.0
        %454 = vmatprep.subr.mxu0 0.0
        %455 = vmatpush2.msra.mxu0 0.0
        %456 = vmatprep.subr.mxu0 0.0
        %457 = vmatpush2.msra.mxu0 0.0
        %458 = vmatprep.subr.mxu0 0.0
        %459 = vmatpush2.msra.mxu0 0.0
        %460 = vmatprep.subr.mxu0 0.0
        %461 = vmatpush2.msra.mxu0 0.0
        %462 = vmatprep.subr.mxu0 0.0
        %463 = vmatpush2.msra.mxu0 0.0
        %464 = vmatprep.subr.mxu0 0.0
        %465 = vmatpush2.msra.mxu0 0.0
        %466 = vmatprep.subr.mxu0 0.0
        %467 = vmatpush2.msra.mxu0 0.0
        %468 = vmatprep.subr.mxu0 0.0
        %469 = vmatpush2.msra.mxu0 0.0
        %470 = vmatprep.subr.mxu0 0.0
        %471 = vmatpush2.msra.mxu0 0.0
        %472 = vmatprep.subr.mxu0 0.0
        %473 = vmatpush2.msra.mxu0 0.0
        %474 = vmatprep.subr.mxu0 0.0
        %475 = vmatpush2.msra.mxu0 0.0
        %476 = vmatprep.subr.mxu0 0.0
        %477 = vmatpush2.msra.mxu0 0.0
        %478 = vmatprep.subr.mxu0 0.0
        %479 = vmatpush2.msra.mxu0 0.0
        %480 = vmatprep.subr.mxu0 0.0
        %481 = vmatpush2.msra.mxu0 0.0
        %482 = vmatprep.subr.mxu0 0.0
        %483 = vmatpush2.msra.mxu0 0.0
        %484 = vmatprep.mubr.f32.mxu0 0.0
        %485 = vmatmul.mubr.f32.gmra.mxu0 %v344
        %v486 = vpop.f32.mrf.mxu0
        %v487 = vadd.f32 0.0, %v486
        %v488 = vpop.f32.mrf.mxu0
        %489 = vdwg.mxu0
        %490 = vst.msk [vmem:[%s299] sm:$0xff] %vm308, %v413
        %491 = vst.msk [vmem:[%s306] sm:$0xff] %vm308, %v487
        %s492 = sand.u32 %s146, 1
        %s493 = scalar_lea.sflag [#allocation4], %s492
        %s494 = sand.u32 %s146, 1
        %s495 = smul.addr %s494, 8
        %s496 = scalar_lea.vmem [#allocation8], %s495
        %s497 = sand.u32 %s172, 1
        %s498 = scalar_lea.sflag [#allocation10], %s497
        %s499 = sand.u32 %s172, 1
        %s500 = smul.addr %s499, 8
        %s501 = scalar_lea.vmem [#allocation9], %s500
        // Predicated region
        $region53: #{tpu_custom_call.1} parent=39 // pred_check
          %p502 = pneg %p156
        $region54: #{tpu_custom_call.1} parent=39 // pred_check_branch
          %504 = sbr.rel (%p502) target = $region56
        $region55: #{tpu_custom_call.1} parent=39 // pred_region
          %s506 = ssub.s32 128, 128
          %507 = vsyncadd %s493, %s506
          %s508 = smul.addr %s28, 128
          %s509 = scalar_lea.hbm %s5, %s508
          %s511 = sshll.u32 %s496, 4
          %s512 = int_to_ptr.vmem [resolvable:$true] %s511
          %514 = dma.vmem_to_hbm [thread:$0]  %s512, 128, %s509, %s493
        $region56: #{tpu_custom_call.1} parent=39 // pred_fallthru
          _
        // Predicated region
        $region57: #{tpu_custom_call.1} parent=39 // pred_check
          %p515 = pneg %p182
        $region58: #{tpu_custom_call.1} parent=39 // pred_check_branch
          %517 = sbr.rel (%p515) target = $region60
        $region59: #{tpu_custom_call.1} parent=39 // pred_region
          %s519 = ssub.s32 128, 128
          %520 = vsyncadd %s498, %s519
          %s521 = smul.addr %s28, 128
          %s522 = scalar_lea.hbm %s6, %s521
          %s524 = sshll.u32 %s501, 4
          %s525 = int_to_ptr.vmem [resolvable:$true] %s524
          %527 = dma.vmem_to_hbm [thread:$0]  %s525, 128, %s522, %s498
        $region60: #{tpu_custom_call.1} parent=39 // pred_fallthru
          _
      $region40: #{tpu_custom_call.1} parent=5 // pred_fallthru
        _
      %p528 = scmp.le.s32.totalorder 2, %s23
      // Predicated region
      $region61: #{tpu_custom_call.1} parent=5 // pred_check
        %p529 = pneg %p528
      $region62: #{tpu_custom_call.1} parent=5 // pred_check_branch
        %531 = sbr.rel (%p529) target = $region64
      $region63: #{tpu_custom_call.1} parent=5 // pred_region
        %s532 = ssub.s32 %s23, 2
        // Predicated region
        $region65: #{tpu_custom_call.1} parent=63 // pred_check
          %p533 = pneg %p162
        $region66: #{tpu_custom_call.1} parent=63 // pred_check_branch
          %535 = sbr.rel (%p533) target = $region68
        $region67: #{tpu_custom_call.1} parent=63 // pred_region
          %s536 = sand.u32 %s147, 1
          %s537 = scalar_lea.sflag [#allocation4], %s536
          %s538 = sand.u32 %s147, 1
          %s539 = smul.addr %s538, 8
          %s540 = scalar_lea.vmem [#allocation8], %s539
          %541 = dma.done %s537, 128
        $region68: #{tpu_custom_call.1} parent=63 // pred_fallthru
          _
        // Predicated region
        $region69: #{tpu_custom_call.1} parent=63 // pred_check
          %p542 = pneg %p188
        $region70: #{tpu_custom_call.1} parent=63 // pred_check_branch
          %544 = sbr.rel (%p542) target = $region72
        $region71: #{tpu_custom_call.1} parent=63 // pred_region
          %s545 = sand.u32 %s173, 1
          %s546 = scalar_lea.sflag [#allocation10], %s545
          %s547 = sand.u32 %s173, 1
          %s548 = smul.addr %s547, 8
          %s549 = scalar_lea.vmem [#allocation9], %s548
          %550 = dma.done %s546, 128
        $region72: #{tpu_custom_call.1} parent=63 // pred_fallthru
          _
      $region64: #{tpu_custom_call.1} parent=5 // pred_fallthru
        _
    $region6: #{tpu_custom_call.1} parent=1 // loop_footer
      %s27 = sadd.s32 1, %s23
    $region7: #{tpu_custom_call.1} parent=1 // loop_footer_branch
      %22 = sbr.rel target = $region3
    $region8: #{tpu_custom_call.1} parent=1 // loop_exit
      _
    %551 = vsyncpa [#allocation3], 1
    %s552 = scalar_lea.sflag [#allocation3], 1
    %553 = vsyncpa %s552, 1
    %554 = vsyncpa [#allocation6], 1
    %555 = vsyncpa [#allocation4], 1
    %s556 = scalar_lea.sflag [#allocation4], 1
    %557 = vsyncpa %s556, 1
    %558 = vsyncpa [#allocation10], 1
    %s559 = scalar_lea.sflag [#allocation10], 1
    %560 = vsyncpa %s559, 1

</llo_original>
